<compile_context>
chip_gen: v7x
topology: tpu7x:2x2x1
jax: 0.10.0
libtpu: 0.0.40
codegen_flags: <defaults>
</compile_context>

<pallas_src>
import jax
import jax.numpy as jnp
from jax import lax
from jax.experimental import pallas as pl
from jax.experimental.pallas import tpu as pltpu

_EPS = 1e-12  # F.normalize default eps


def _rmsnorm2d_kernel(x_ref, g_ref, o_ref):
    # x_ref: (1, C, TW) block; g_ref: (1, C, TW) lane-dense f32 (already
    # multiplied by sqrt(C)); o_ref: (1, C, TW).
    x = x_ref[...].astype(jnp.float32)
    ss = jnp.sum(x * x, axis=1, keepdims=True)            # (1, 1, TW)
    # rsqrt on the EUP; max(ss, eps^2) == (max(sqrt(ss), eps))^-2 since
    # ss >= 0 and 1e-24 is a normal f32.
    inv = lax.rsqrt(jnp.maximum(ss, _EPS * _EPS))
    o_ref[...] = (x * inv * g_ref[...]).astype(o_ref.dtype)


def _round_up(v, m):
    return (v + m - 1) // m * m


def _vmem_limit_bytes():
    """Scoped-VMEM limit, clamped to a per-TensorCore-safe window."""
    try:
        cap = pltpu.get_tpu_info().vmem_capacity_bytes
    except Exception:
        cap = 64 << 20  # conservative (v7x per-TC VMEM)
    # `cap` may be per-chip on multi-core parts (e.g. 128 MiB reported on a
    # 2-TC chip with 64 MiB per TC): clamp to [32 MiB, 48 MiB] so big
    # double-buffered tiles stay safe everywhere with compiler headroom.
    return int(min(48 << 20, max(32 << 20, cap // 2)))


def _num_tensorcores():
    """Best-effort TensorCore-per-chip count (megacore detection)."""
    try:
        kind = getattr(jax.devices()[0], "device_kind", "").lower()
        if "v4" in kind or "v5p" in kind or "v7" in kind:
            return 2
    except Exception:
        pass
    return 1


def _pick_tile_w(C_pad, hw, itemsize, vmem_limit, num_tc, batch):
    """Lane tile: byte-budgeted, 128-multiple, megacore-balanced."""
    hw_r = _round_up(hw, 128)
    # Resident bytes per lane: 2x double-buffered input + 2x double-buffered
    # output (x dtype) + 2x the lane-dense f32 gain slab, with C padded to
    # the sublane pack so VMEM accounting matches reality for small C / bf16.
    per_lane = C_pad * (4 * itemsize + 2 * 4)
    budget = int(vmem_limit * 0.7)
    max_by_vmem = max(128, (budget // per_lane) // 128 * 128)
    # Target ~4 MiB of VMEM for each x block so the per-step DMA amortizes
    # the ~0.35 us grid-step overhead even when C is tiny.
    target = max(128, ((4 << 20) // (C_pad * itemsize)) // 128 * 128)
    tile = min(target, max_by_vmem, hw_r)

    if num_tc >= 2:
        # Prefer a tile whose total parallel step count is a multiple of the
        # core count (balanced megacore split) without dropping below 512
        # lanes (or below the only feasible size for tiny spatial extents).
        floor = max(128, min(512, tile))
        t = tile
        while t >= floor:
            steps = batch * (-(-hw_r // t))
            if steps % num_tc == 0:
                return t
            t -= 128
    return tile


def rmsnorm2d(x, g):
    """x: (N, C, H, W) float array, g: (1, C, 1, 1) parameter."""
    N, C, H, W = x.shape
    HW = H * W
    scale = float(C) ** 0.5
    itemsize = jnp.dtype(x.dtype).itemsize

    # Metadata-only reshape: no extra HBM traffic.
    x_flat = x.reshape(N, C, HW)

    vmem_limit = _vmem_limit_bytes()
    num_tc = _num_tensorcores()
    sublane_pack = max(8, 32 // itemsize)          # 8 for f32, 16 for bf16
    C_pad = _round_up(C, sublane_pack)
    tile_w = _pick_tile_w(C_pad, HW, itemsize, vmem_limit, num_tc, N)
    steps = pl.cdiv(HW, tile_w)

    # sqrt(C) folded into g once; lane-dense slab so the per-step multiply is
    # a plain aligned vmul (constant block index -> fetched once, resident).
    g_slab = jnp.broadcast_to(
        g.reshape(1, C, 1).astype(jnp.float32) * scale, (1, C, tile_w))

    out = pl.pallas_call(
        _rmsnorm2d_kernel,
        out_shape=jax.ShapeDtypeStruct((N, C, HW), x.dtype),
        grid_spec=pltpu.PrefetchScalarGridSpec(
            num_scalar_prefetch=0,
            grid=(N, steps),
            in_specs=[
                pl.BlockSpec((1, C, tile_w), lambda n, s: (n, 0, s)),
                pl.BlockSpec((1, C, tile_w), lambda n, s: (0, 0, 0)),
            ],
            out_specs=pl.BlockSpec((1, C, tile_w), lambda n, s: (n, 0, s)),
        ),
        compiler_params=pltpu.CompilerParams(
            dimension_semantics=("parallel", "parallel"),
            vmem_limit_bytes=vmem_limit,
        ),
        cost_estimate=pl.CostEstimate(
            flops=3 * N * C * HW,
            transcendentals=N * HW,
            bytes_accessed=2 * N * C * HW * itemsize + C * tile_w * 4,
        ),
    )(x_flat, g_slab)

    return out.reshape(N, C, H, W)


def rmsnorm2d_ref(x, g):
    # Pure-JAX reference mirroring F.normalize(x, dim=1) * g * sqrt(C).
    C = x.shape[1]
    norm = jnp.sqrt(jnp.sum(x * x, axis=1, keepdims=True))
    return x / jnp.maximum(norm, _EPS) * g * (float(C) ** 0.5)


if __name__ == "__main__":
    key = jax.random.PRNGKey(0)

    # Main case: spatial extent a multiple of 128.
    N, C, H, W = 2, 4, 16, 16
    x = jax.random.normal(key, (N, C, H, W), dtype=jnp.float32)
    # nn.Parameter(torch.ones(1, dim, 1, 1)) -> deterministic ones init.
    g = jnp.ones((1, C, 1, 1), dtype=jnp.float32)

    y = jax.block_until_ready(rmsnorm2d(x, g))
    y_ref = rmsnorm2d_ref(x, g)
    assert y.shape == (N, C, H, W)
    assert jnp.allclose(y, y_ref, atol=1e-5, rtol=1e-5)

    # Ragged case: H*W not a multiple of 128 exercises the masked trailing
    # block (no wrapper-side pad / slice anymore).
    H2, W2 = 10, 10
    x2 = jax.random.normal(jax.random.PRNGKey(1), (N, C, H2, W2), jnp.float32)
    y2 = jax.block_until_ready(rmsnorm2d(x2, g))
    y2_ref = rmsnorm2d_ref(x2, g)
    assert y2.shape == (N, C, H2, W2)
    assert jnp.allclose(y2, y2_ref, atol=1e-5, rtol=1e-5)

    print("KERNEL_OK")
</pallas_src>

<mosaic_0001>
module attributes {stable_mosaic.version = 11 : i64} {
  func.func @_rmsnorm2d_kernel(%arg0: i32, %arg1: i32, %arg2: memref<1x4x256xf32, #tpu.memory_space<vmem>>, %arg3: memref<1x4x256xf32, #tpu.memory_space<vmem>>, %arg4: memref<1x4x256xf32, #tpu.memory_space<vmem>>) attributes {dimension_semantics = [#tpu.dimension_semantics<parallel>, #tpu.dimension_semantics<parallel>], iteration_bounds = array<i64: 2, 1>, scalar_prefetch = 0 : i64, scratch_operands = 0 : i64, tpu.core_type = #tpu.core_type<tc>, window_params = [{transform_indices = @transform_0, window_bounds = array<i64: 1, 4, 256>}, {pipeline_mode = #tpu.pipeline_mode<synchronous>, transform_indices = @transform_1, window_bounds = array<i64: 1, 4, 256>}, {transform_indices = @transform_2, window_bounds = array<i64: 1, 4, 256>}]} {
    %c0 = arith.constant 0 : index
    %c0_0 = arith.constant 0 : index
    %c0_1 = arith.constant 0 : index
    %0 = vector.load %arg2[%c0, %c0_0, %c0_1] : memref<1x4x256xf32, #tpu.memory_space<vmem>>, vector<1x4x256xf32>
    %1 = arith.mulf %0, %0 : vector<1x4x256xf32>
    %cst = arith.constant dense<0.000000e+00> : vector<1x256xf32>
    %2 = vector.multi_reduction <add>, %1, %cst [1] : vector<1x4x256xf32> to vector<1x256xf32>
    %3 = vector.shape_cast %2 : vector<1x256xf32> to vector<1x1x256xf32>
    %cst_2 = arith.constant 1.000000e-24 : f32
    %4 = vector.broadcast %cst_2 : f32 to vector<1x1x256xf32>
    %5 = arith.maximumf %3, %4 : vector<1x1x256xf32>
    %6 = math.rsqrt %5 : vector<1x1x256xf32>
    %7 = vector.broadcast %6 : vector<1x1x256xf32> to vector<1x4x256xf32>
    %8 = arith.mulf %0, %7 : vector<1x4x256xf32>
    %c0_3 = arith.constant 0 : index
    %c0_4 = arith.constant 0 : index
    %c0_5 = arith.constant 0 : index
    %9 = vector.load %arg3[%c0_3, %c0_4, %c0_5] : memref<1x4x256xf32, #tpu.memory_space<vmem>>, vector<1x4x256xf32>
    %10 = arith.mulf %8, %9 : vector<1x4x256xf32>
    %c0_6 = arith.constant 0 : index
    %c0_7 = arith.constant 0 : index
    %c0_8 = arith.constant 0 : index
    %11 = vector.load %arg4[%c0_6, %c0_7, %c0_8] : memref<1x4x256xf32, #tpu.memory_space<vmem>>, vector<1x4x256xf32>
    tpu.vector_store %arg4[%c0_6, %c0_7, %c0_8], %10 {strides = array<i32>} : memref<1x4x256xf32, #tpu.memory_space<vmem>>, vector<1x4x256xf32>,
    return
  }
  func.func @transform_0(%arg0: i32, %arg1: i32) -> (i32, i32, i32) {
    %c0_i32 = arith.constant 0 : i32
    %c0_i32_0 = arith.constant 0 : i32
    return %arg0, %c0_i32, %arg1 : i32, i32, i32
  }
  func.func @transform_1(%arg0: i32, %arg1: i32) -> (i32, i32, i32) {
    %c0_i32 = arith.constant 0 : i32
    %c0_i32_0 = arith.constant 0 : i32
    %c0_i32_1 = arith.constant 0 : i32
    %c0_i32_2 = arith.constant 0 : i32
    return %c0_i32, %c0_i32_0, %c0_i32_1 : i32, i32, i32
  }
  func.func @transform_2(%arg0: i32, %arg1: i32) -> (i32, i32, i32) {
    %c0_i32 = arith.constant 0 : i32
    %c0_i32_0 = arith.constant 0 : i32
    return %arg0, %c0_i32, %arg1 : i32, i32, i32
  }
}

</mosaic_0001>

<llo_original>
// kernel: tpu_custom_call.1
$region0: #{tpu_custom_call.1}
  #allocation0 [shape = 'u32[]', space=smem, size = 0x4, offset = 0x4, fixed_abs, tag = 'smem constant byte address 0x4 - core index']
  #allocation1 [shape = 'u32[144,128]{1,0:T(1,128)}', space=vmem, size = 0x12000, scoped, tag = 'internal scratch']
  %s0 = inlined_call_operand.hbm [shape: f32[2,4,256], index: 0, kind: input, shape index: {}]
  %s1 = inlined_call_operand.hbm [shape: f32[1,4,256], index: 1, kind: input, shape index: {}]
  %s2 = inlined_call_operand.hbm [shape: f32[2,4,256], index: 2, kind: output, shape index: {}]
  %s3 = sld [smem:[#allocation0]]
  $region49: #{tpu_custom_call.1} parent=0
    _
  %s5 = ssub.s32 1, %s3
  %s6 = scalar_select 0, %s5, %s3
  $region1: #{tpu_custom_call.1} parent=0
    #allocation2 [shape = 'u8[8192]{0}', space=vmem, size = 0x2000, scoped, tag = 'input window, operand 0']
    #allocation3 [shape = 's32[2]{0}', space=sflag, size = 0x8, scoped, tag = 'scoped memory for tpu_custom_call.1']
    #allocation4 [shape = 's32[2]{0}', space=sflag, size = 0x8, scoped, tag = 'scoped memory for tpu_custom_call.1']
    #allocation5 [shape = 'u8[4096]{0}', space=vmem, size = 0x1000, scoped, tag = 'input window, operand 1, single buffered']
    #allocation6 [shape = 's32[1]{0}', space=sflag, size = 0x4, scoped, tag = 'scoped memory for tpu_custom_call.1']
    #allocation7 [shape = 'u8[8192]{0}', space=vmem, size = 0x2000, scoped, tag = 'output window, operand 0']
    %7 = vsyncpa [#allocation3], 0
    %s8 = scalar_lea.sflag [#allocation3], 1
    %9 = vsyncpa %s8, 0
    %10 = vsyncpa [#allocation6], 0
    %11 = vsyncpa [#allocation4], 0
    %s12 = scalar_lea.sflag [#allocation4], 1
    %13 = vsyncpa %s12, 0
    loop: start=0, step=1, limit=4
    $region2: #{tpu_custom_call.1} parent=1 // loop_pre_header
      _
    $region3: #{tpu_custom_call.1} parent=1 // loop_header
      %s15 = sphi 0, %s19
      %p16 = scmp.ge.s32.totalorder %s15, 4
      %s22 = sphi 0, %s34
      %s23 = sphi 0, %s30
      %s24 = sphi 0, %s22
      %s25 = sphi 0, %s23
      %s26 = sphi 0, %s24
      %s27 = sphi 0, %s25
      %s39 = sphi 0, %s41
      %s42 = sphi 0, %s39
      %s43 = sphi 0, %s42
      %s59 = sphi 0, %s43
      %s63 = sphi 0, %s63
      %s65 = sphi 0, %s63
      %s66 = sphi 0, %s65
      %s80 = sphi 0, %s66
      %s88 = sphi 0, %s90
      %s91 = sphi 0, %s88
      %s92 = sphi 0, %s91
      %s108 = sphi 0, %s92
    $region4: #{tpu_custom_call.1} parent=1 // loop_header_branch
      %18 = sbr.rel (%p16) target = $region8
    $region5: #{tpu_custom_call.1} parent=1 // loop_body
      %s20 = ssub.s32 %s15, 1
      %s21 = ssub.s32 %s15, 2
      %s28 = sadd.s32 1, %s23
      %p29 = scmp.ge.s32.totalorder %s28, 1
      %s30 = scalar_select %p29, 0, %s28
      %s31 = sadd.s32 1, %s22
      %s32 = scalar_select %p29, %s31, %s22
      %p33 = scmp.ge.s32.totalorder %s32, 2
      %s34 = scalar_select %p33, 0, %s32
      %s35 = ssub.s32 %s22, %s34
      %s36 = ssub.s32 %s23, %s30
      %s37 = sor.u32 %s35, %s36
      %p38 = scmp.eq.s32.totalorder %s37, 0
      %s40 = sadd.s32 %s39, 1
      %s41 = scalar_select %p38, %s39, %s40
      %p44 = pneg %p38
      %p45 = scmp.eq.s32.totalorder %s15, 1
      %p46 = por %p44, %p45
      %p47 = scmp.ne.s32.totalorder %s39, %s42
      %p48 = scmp.eq.s32.totalorder %s15, 0
      %p49 = por %p47, %p48
      %p50 = scmp.ne.s32.totalorder %s39, %s42
      %p51 = scmp.eq.s32.totalorder %s20, 1
      %p52 = por %p50, %p51
      %p53 = scmp.ne.s32.totalorder %s42, %s43
      %p54 = scmp.eq.s32.totalorder %s20, 0
      %p55 = por %p53, %p54
      %p56 = scmp.ne.s32.totalorder %s42, %s43
      %p57 = scmp.eq.s32.totalorder %s21, 1
      %p58 = por %p56, %p57
      %p60 = scmp.ne.s32.totalorder %s43, %s59
      %p61 = scmp.eq.s32.totalorder %s21, 0
      %p62 = por %p60, %p61
      %s64 = sadd.s32 %s63, 1
      %p67 = scmp.eq.s32.totalorder %s15, 1
      %p68 = scmp.ne.s32.totalorder %s63, %s65
      %p69 = scmp.eq.s32.totalorder %s15, 0
      %p70 = por %p68, %p69
      %p71 = scmp.ne.s32.totalorder %s63, %s65
      %p72 = scmp.eq.s32.totalorder %s20, 1
      %p73 = por %p71, %p72
      %p74 = scmp.ne.s32.totalorder %s65, %s66
      %p75 = scmp.eq.s32.totalorder %s20, 0
      %p76 = por %p74, %p75
      %p77 = scmp.ne.s32.totalorder %s65, %s66
      %p78 = scmp.eq.s32.totalorder %s21, 1
      %p79 = por %p77, %p78
      %p81 = scmp.ne.s32.totalorder %s66, %s80
      %p82 = scmp.eq.s32.totalorder %s21, 0
      %p83 = por %p81, %p82
      %s84 = ssub.s32 %s22, %s34
      %s85 = ssub.s32 %s23, %s30
      %s86 = sor.u32 %s84, %s85
      %p87 = scmp.eq.s32.totalorder %s86, 0
      %s89 = sadd.s32 %s88, 1
      %s90 = scalar_select %p87, %s88, %s89
      %p93 = pneg %p87
      %p94 = scmp.eq.s32.totalorder %s15, 1
      %p95 = por %p93, %p94
      %p96 = scmp.ne.s32.totalorder %s88, %s91
      %p97 = scmp.eq.s32.totalorder %s15, 0
      %p98 = por %p96, %p97
      %p99 = scmp.ne.s32.totalorder %s88, %s91
      %p100 = scmp.eq.s32.totalorder %s20, 1
      %p101 = por %p99, %p100
      %p102 = scmp.ne.s32.totalorder %s91, %s92
      %p103 = scmp.eq.s32.totalorder %s20, 0
      %p104 = por %p102, %p103
      %p105 = scmp.ne.s32.totalorder %s91, %s92
      %p106 = scmp.eq.s32.totalorder %s21, 1
      %p107 = por %p105, %p106
      %p109 = scmp.ne.s32.totalorder %s92, %s108
      %p110 = scmp.eq.s32.totalorder %s21, 0
      %p111 = por %p109, %p110
      %p112 = scmp.le.s32.totalorder 1, %s15
      %p113 = scmp.lt.s32.totalorder %s15, 3
      %p114 = pnand %p112, %p113
      %p115 = pneg %p114
      // Predicated region
      $region9: #{tpu_custom_call.1} parent=5 // pred_check
        _
      $region10: #{tpu_custom_call.1} parent=5 // pred_check_branch
        %117 = sbr.rel (%p114) target = $region12
      $region11: #{tpu_custom_call.1} parent=5 // pred_region
        %s118 = ssub.s32 %s15, 1
        // Predicated region
        $region13: #{tpu_custom_call.1} parent=11 // pred_check
          %p119 = pneg %p76
        $region14: #{tpu_custom_call.1} parent=11 // pred_check_branch
          %121 = sbr.rel (%p119) target = $region16
        $region15: #{tpu_custom_call.1} parent=11 // pred_region
          %s123 = ssub.s32 128, 128
          %124 = vsyncadd [#allocation6], %s123
          %s126 = sshll.u32 [#allocation5], 4
          %s127 = int_to_ptr.vmem [resolvable:$true] %s126
          %129 = dma.hbm_to_vmem [thread:$0]  %s1, 128, %s127, [#allocation6]
        $region16: #{tpu_custom_call.1} parent=11 // pred_fallthru
          _
      $region12: #{tpu_custom_call.1} parent=5 // pred_fallthru
        _
      %p130 = scmp.lt.s32.totalorder %s15, 2
      // Predicated region
      $region17: #{tpu_custom_call.1} parent=5 // pred_check
        %p131 = pneg %p130
      $region18: #{tpu_custom_call.1} parent=5 // pred_check_branch
        %133 = sbr.rel (%p131) target = $region20
      $region19: #{tpu_custom_call.1} parent=5 // pred_region
        // Predicated region
        $region21: #{tpu_custom_call.1} parent=19 // pred_check
          %p134 = pneg %p49
        $region22: #{tpu_custom_call.1} parent=19 // pred_check_branch
          %136 = sbr.rel (%p134) target = $region24
        $region23: #{tpu_custom_call.1} parent=19 // pred_region
          %s137 = sand.u32 %s39, 1
          %s138 = scalar_lea.sflag [#allocation3], %s137
          %s139 = sand.u32 %s39, 1
          %s140 = smul.addr %s139, 8
          %s141 = scalar_lea.vmem [#allocation2], %s140
          %s142 = smul.u32 2, %s23
          %s144 = ssub.s32 128, 128
          %145 = vsyncadd %s138, %s144
          %s146 = smul.addr %s22, 2
          %s147 = sadd.s32 %s142, %s146
          %s148 = smul.addr %s147, 64
          %s149 = scalar_lea.hbm %s0, %s148
          %s151 = sshll.u32 %s141, 4
          %s152 = int_to_ptr.vmem [resolvable:$true] %s151
          %154 = dma.hbm_to_vmem [thread:$0]  %s149, 128, %s152, %s138
        $region24: #{tpu_custom_call.1} parent=19 // pred_fallthru
          _
      $region20: #{tpu_custom_call.1} parent=5 // pred_fallthru
        _
      %p155 = scmp.le.s32.totalorder 1, %s15
      %p156 = scmp.lt.s32.totalorder %s15, 3
      %p157 = pnand %p155, %p156
      %p158 = pneg %p157
      // Predicated region
      $region25: #{tpu_custom_call.1} parent=5 // pred_check
        _
      $region26: #{tpu_custom_call.1} parent=5 // pred_check_branch
        %160 = sbr.rel (%p157) target = $region28
      $region27: #{tpu_custom_call.1} parent=5 // pred_region
        %s161 = ssub.s32 %s15, 1
        %s162 = sand.u32 %s42, 1
        %s163 = scalar_lea.sflag [#allocation3], %s162
        %s164 = sand.u32 %s42, 1
        %s165 = smul.addr %s164, 8
        %s166 = scalar_lea.vmem [#allocation2], %s165
        // Predicated region
        $region29: #{tpu_custom_call.1} parent=27 // pred_check
          %p167 = pneg %p55
        $region30: #{tpu_custom_call.1} parent=27 // pred_check_branch
          %169 = sbr.rel (%p167) target = $region32
        $region31: #{tpu_custom_call.1} parent=27 // pred_region
          %170 = dma.done %s163, 128
        $region32: #{tpu_custom_call.1} parent=27 // pred_fallthru
          _
        // Predicated region
        $region33: #{tpu_custom_call.1} parent=27 // pred_check
          %p171 = pneg %p76
        $region34: #{tpu_custom_call.1} parent=27 // pred_check_branch
          %173 = sbr.rel (%p171) target = $region36
        $region35: #{tpu_custom_call.1} parent=27 // pred_region
          %174 = dma.done [#allocation6], 128
        $region36: #{tpu_custom_call.1} parent=27 // pred_fallthru
          _
        %s175 = sand.u32 %s42, 1
        %s176 = scalar_lea.sflag [#allocation3], %s175
        %s177 = sand.u32 %s42, 1
        %s178 = smul.addr %s177, 8
        %s179 = scalar_lea.vmem [#allocation2], %s178
        %p180 = pneg %p55
        %p181 = pneg %p52
        %p182 = pneg %p76
        %p183 = pneg %p73
        %p184 = pneg %p104
        %p185 = pneg %p101
        %s186 = sand.u32 %s91, 1
        %s187 = scalar_lea.sflag [#allocation4], %s186
        %s188 = sand.u32 %s91, 1
        %s189 = smul.addr %s188, 8
        %s190 = scalar_lea.vmem [#allocation7], %s189
        %s191 = smul.u32 2, %s25
        %s192 = smul.u32 2, %s25
        %v193 = vld [vmem:[%s166] sm:$0xff]
        %v194 = vmul.f32 %v193, %v193
        %v196 = vcombine.high %v194, %v194
        %vm198 = vcmask 1043456
        %v199 = vsel %vm198, %v194, 0.0
        %v200 = vrot.slane %v199, 4
        %v201 = vadd.f32 %v199, %v200
        %v202 = vrot.slane %v201, 2
        %v203 = vadd.f32 %v201, %v202
        %v204 = vrot.slane %v203, 1
        %v205 = vadd.f32 %v203, %v204
        %v206 = vsel %vm198, %v196, 0.0
        %v207 = vrot.slane %v206, 4
        %v208 = vadd.f32 %v206, %v207
        %v209 = vrot.slane %v208, 2
        %v210 = vadd.f32 %v208, %v209
        %v211 = vrot.slane %v210, 1
        %v212 = vadd.f32 %v210, %v211
        %v213 = vmax.f32 %v205, 1e-24
        %v214 = vmax.f32 %v212, 1e-24
        %v215 = vrsqrt.pop %v213
        %v216 = vrsqrt.pop %v214
        %v219 = vcombine.low %v215, %v216
        %v221 = vmul.f32 %v193, %v219
        %v222 = vld [vmem:[#allocation5] sm:$0xff]
        %v223 = vmul.f32 %v221, %v222
        %224 = vst [vmem:[%s190] sm:$0xff] %v223
        %s225 = sand.u32 %s91, 1
        %s226 = scalar_lea.sflag [#allocation4], %s225
        %s227 = sand.u32 %s91, 1
        %s228 = smul.addr %s227, 8
        %s229 = scalar_lea.vmem [#allocation7], %s228
        // Predicated region
        $region37: #{tpu_custom_call.1} parent=27 // pred_check
          %p230 = pneg %p101
        $region38: #{tpu_custom_call.1} parent=27 // pred_check_branch
          %232 = sbr.rel (%p230) target = $region40
        $region39: #{tpu_custom_call.1} parent=27 // pred_region
          %s233 = smul.u32 2, %s25
          %s235 = ssub.s32 128, 128
          %236 = vsyncadd %s226, %s235
          %s237 = smul.addr %s24, 2
          %s238 = sadd.s32 %s233, %s237
          %s239 = smul.addr %s238, 64
          %s240 = scalar_lea.hbm %s2, %s239
          %s242 = sshll.u32 %s229, 4
          %s243 = int_to_ptr.vmem [resolvable:$true] %s242
          %245 = dma.vmem_to_hbm [thread:$0]  %s243, 128, %s240, %s226
        $region40: #{tpu_custom_call.1} parent=27 // pred_fallthru
          _
      $region28: #{tpu_custom_call.1} parent=5 // pred_fallthru
        _
      %p246 = scmp.le.s32.totalorder 2, %s15
      // Predicated region
      $region41: #{tpu_custom_call.1} parent=5 // pred_check
        %p247 = pneg %p246
      $region42: #{tpu_custom_call.1} parent=5 // pred_check_branch
        %249 = sbr.rel (%p247) target = $region44
      $region43: #{tpu_custom_call.1} parent=5 // pred_region
        %s250 = ssub.s32 %s15, 2
        // Predicated region
        $region45: #{tpu_custom_call.1} parent=43 // pred_check
          %p251 = pneg %p107
        $region46: #{tpu_custom_call.1} parent=43 // pred_check_branch
          %253 = sbr.rel (%p251) target = $region48
        $region47: #{tpu_custom_call.1} parent=43 // pred_region
          %s254 = sand.u32 %s92, 1
          %s255 = scalar_lea.sflag [#allocation4], %s254
          %s256 = sand.u32 %s92, 1
          %s257 = smul.addr %s256, 8
          %s258 = scalar_lea.vmem [#allocation7], %s257
          %259 = dma.done %s255, 128
        $region48: #{tpu_custom_call.1} parent=43 // pred_fallthru
          _
      $region44: #{tpu_custom_call.1} parent=5 // pred_fallthru
        _
    $region6: #{tpu_custom_call.1} parent=1 // loop_footer
      %s19 = sadd.s32 1, %s15
    $region7: #{tpu_custom_call.1} parent=1 // loop_footer_branch
      %14 = sbr.rel target = $region3
    $region8: #{tpu_custom_call.1} parent=1 // loop_exit
      _
    %260 = vsyncpa [#allocation3], 1
    %s261 = scalar_lea.sflag [#allocation3], 1
    %262 = vsyncpa %s261, 1
    %263 = vsyncpa [#allocation6], 1
    %264 = vsyncpa [#allocation4], 1
    %s265 = scalar_lea.sflag [#allocation4], 1
    %266 = vsyncpa %s265, 1

</llo_original>
